<compile_context>
chip_gen: v5e
topology: v5e:2x2
jax: 0.10.0
libtpu: 0.0.40
codegen_flags: <defaults>
</compile_context>

<pallas_src>
import jax
import jax.numpy as jnp
from jax import lax
from jax.experimental import pallas as pl
from jax.experimental.pallas import tpu as pltpu

_LANE = 128


def _round_up(v: int, m: int) -> int:
    return (v + m - 1) // m * m


def _cdiv(a: int, b: int) -> int:
    return (a + b - 1) // b


def _vmem_capacity_bytes() -> int:
    """Physical per-core VMEM, with a conservative (v7x) fallback."""
    try:
        info = pltpu.get_tpu_info()
        cap = getattr(info, "vmem_capacity_bytes", None)
        if cap:
            return int(cap)
    except Exception:
        pass
    return 64 * 1024 * 1024


# ----------------------------- kernels --------------------------------------


def _logreg_small_d_kernel(xT_ref, w_ref, b_ref, o_ref):
    # xT_ref: (D, TILE_N) VMEM | w_ref: (1, D) VMEM | b_ref: (1,) SMEM | o_ref: (1, TILE_N)
    z = jnp.dot(w_ref[...], xT_ref[...], preferred_element_type=jnp.float32)
    o_ref[...] = jax.nn.sigmoid(z + b_ref[0]).astype(o_ref.dtype)


def _logreg_large_d_kernel(x_ref, w_ref, b_ref, o_ref, acc_ref):
    # x_ref: (TILE_N, TILE_K) | w_ref: (1, TILE_K) | b_ref: (1,) SMEM
    # o_ref: (1, TILE_N)      | acc_ref: (1, TILE_N) f32 scratch (resident across K axis)
    k = pl.program_id(1)

    @pl.when(k == 0)
    def _():
        acc_ref[...] = jnp.zeros_like(acc_ref)

    # (1,K) x (T,K) -> (1,T): trans-B contraction (same pattern as q @ k^T), lane-dense out.
    acc_ref[...] += lax.dot_general(
        w_ref[...],
        x_ref[...],
        dimension_numbers=(((1,), (1,)), ((), ())),
        preferred_element_type=jnp.float32,
    )

    @pl.when(k == pl.num_programs(1) - 1)
    def _():
        o_ref[...] = jax.nn.sigmoid(acc_ref[...] + b_ref[0]).astype(o_ref.dtype)


# ----------------------------- wrappers -------------------------------------


def _pick_tile_n(n: int, per_row_bytes: int, x_tile_budget: int) -> tuple[int, int]:
    """Lane-dense batch tile under the VMEM budget, keeping >=2 grid steps when possible."""
    max_tile = max(_LANE, (x_tile_budget // max(1, per_row_bytes)) // _LANE * _LANE)
    n_pad128 = _round_up(n, _LANE)
    tile_n = min(max_tile, 2048, n_pad128)
    if n_pad128 >= 2 * _LANE:  # give v7x's second TensorCore its own tiles
        tile_n = min(tile_n, _round_up(_cdiv(n_pad128, 2), _LANE))
    return tile_n, _cdiv(n, tile_n)


def _forward_small_d(x, w, b, n, d, itemsize, x_tile_budget, vmem_limit):
    d_sub = _round_up(max(d, 1), 8)  # sublane-padded footprint of the (D, TILE_N) block
    tile_n, num_tiles = _pick_tile_n(n, d_sub * itemsize, x_tile_budget)
    n_pad = num_tiles * tile_n

    xT = x.T  # (D, N) feature-major; single fused copy (+pad) in the wrapper
    if n_pad != n:
        xT = jnp.pad(xT, ((0, 0), (0, n_pad - n)))

    out = pl.pallas_call(
        _logreg_small_d_kernel,
        out_shape=jax.ShapeDtypeStruct((num_tiles, 1, tile_n), x.dtype),
        grid=(num_tiles,),
        in_specs=[
            pl.BlockSpec((d, tile_n), lambda i: (0, i)),             # x tile (feature-major)
            pl.BlockSpec((1, d), lambda i: (0, 0)),                  # weight row
            pl.BlockSpec(memory_space=pltpu.MemorySpace.SMEM),       # bias scalar
        ],
        out_specs=pl.BlockSpec((None, 1, tile_n), lambda i: (i, 0, 0)),
        compiler_params=pltpu.CompilerParams(
            dimension_semantics=("parallel",),
            vmem_limit_bytes=vmem_limit,
        ),
    )(xT, w, b)
    return out.reshape(n_pad, 1)[:n]


def _forward_large_d(x, w, b, n, d, itemsize, x_tile_budget, vmem_limit):
    # K (feature) tiling: lane-dense tile_k that divides D when D is a multiple of 128.
    if d % _LANE == 0:
        tile_k = min(d, 2048)
        while d % tile_k != 0:
            tile_k -= _LANE
    else:
        # TODO(synk): mask the ragged K tail in-kernel instead of taking the full-D block.
        tile_k = d
    num_k = d // tile_k

    tile_n, num_tiles = _pick_tile_n(n, tile_k * itemsize, x_tile_budget)
    # No jnp.pad of x: the ragged last batch block reads out-of-bounds rows (garbage),
    # whose output columns are sliced off below.

    out = pl.pallas_call(
        _logreg_large_d_kernel,
        out_shape=jax.ShapeDtypeStruct((num_tiles, 1, tile_n), x.dtype),
        grid=(num_tiles, num_k),
        in_specs=[
            pl.BlockSpec((tile_n, tile_k), lambda i, k: (i, k)),     # x tile (row-major)
            pl.BlockSpec((1, tile_k), lambda i, k: (0, k)),          # weight slice
            pl.BlockSpec(memory_space=pltpu.MemorySpace.SMEM),       # bias scalar
        ],
        out_specs=pl.BlockSpec((None, 1, tile_n), lambda i, k: (i, 0, 0)),
        scratch_shapes=[pltpu.VMEM((1, tile_n), jnp.float32)],
        compiler_params=pltpu.CompilerParams(
            dimension_semantics=("parallel", "arbitrary"),
            vmem_limit_bytes=vmem_limit,
        ),
    )(x, w, b)
    return out.reshape(num_tiles * tile_n, 1)[:n]


def logistic_regression_forward(x, weight, bias):
    """sigmoid(x @ weight.T + bias)   (torch: sigmoid(nn.Linear(in_size, 1)(x)))

    x: [N, D] (f32 or bf16); weight: [1, D] (torch Linear layout); bias: [1].
    """
    n, d = x.shape
    assert weight.shape == (1, d)
    itemsize = jnp.dtype(x.dtype).itemsize

    vmem_cap = _vmem_capacity_bytes()
    vmem_limit = min(vmem_cap // 2, 64 * 1024 * 1024)  # 32 MiB on v7x, 64 MiB on v5e/v6e
    x_tile_budget = vmem_limit // 4                     # double-buffered x tile ~ half the limit

    w = weight.astype(x.dtype)                          # keep caller dtype (bf16 halves HBM bytes)
    b = bias.reshape(1).astype(jnp.float32)             # scalar -> SMEM; f32 epilogue

    if d <= _LANE:
        return _forward_small_d(x, w, b, n, d, itemsize, x_tile_budget, vmem_limit)
    return _forward_large_d(x, w, b, n, d, itemsize, x_tile_budget, vmem_limit)


# ----------------------------- self-test ------------------------------------

if __name__ == "__main__":
    key = jax.random.PRNGKey(0)
    k1, k2, k3, k4, k5 = jax.random.split(key, 5)

    def ref(x, w, b):
        return jax.nn.sigmoid(x @ w.T + b)

    # Case 1: mirrors the torch module usage (x = [[1., 2.]]) -> in_size = 2.
    x1 = jax.random.normal(k1, (8, 2), dtype=jnp.float32)
    w1 = jax.random.normal(k2, (1, 2), dtype=jnp.float32) * 0.5
    b1 = jax.random.normal(k3, (1,), dtype=jnp.float32) * 0.1
    o1 = jax.block_until_ready(logistic_regression_forward(x1, w1, b1))
    assert o1.shape == (8, 1)
    assert jnp.allclose(o1, ref(x1, w1, b1), atol=2e-5, rtol=1e-4)

    # Case 2: multi-tile batch with padding (small-D feature-major path, 2 grid steps).
    x2 = jax.random.normal(k4, (300, 2), dtype=jnp.float32)
    o2 = jax.block_until_ready(logistic_regression_forward(x2, w1, b1))
    assert o2.shape == (300, 1)
    assert jnp.allclose(o2, ref(x2, w1, b1), atol=2e-5, rtol=1e-4)

    # Case 3: large-D (K-tiled accumulator) path with a ragged last batch tile.
    x3 = jax.random.normal(k5, (192, 256), dtype=jnp.float32)
    w3 = jax.random.normal(k2, (1, 256), dtype=jnp.float32) * 0.05
    o3 = jax.block_until_ready(logistic_regression_forward(x3, w3, b1))
    assert o3.shape == (192, 1)
    assert jnp.allclose(o3, ref(x3, w3, b1), atol=2e-5, rtol=1e-4)

    print("KERNEL_OK")
</pallas_src>

<mosaic_0001>
module attributes {stable_mosaic.version = 11 : i64} {
  func.func @_logreg_small_d_kernel(%arg0: i32, %arg1: memref<2x128xf32, #tpu.memory_space<vmem>>, %arg2: memref<1x2xf32, #tpu.memory_space<vmem>>, %arg3: memref<1xf32, #tpu.memory_space<smem>>, %arg4: memref<1x1x128xf32, #tpu.memory_space<vmem>>) attributes {dimension_semantics = [#tpu.dimension_semantics<parallel>], iteration_bounds = array<i64: 1>, scalar_prefetch = 0 : i64, scratch_operands = 0 : i64, tpu.core_type = #tpu.core_type<tc>, window_params = [{transform_indices = @transform_0, window_bounds = array<i64: 2, 128>}, {pipeline_mode = #tpu.pipeline_mode<synchronous>, transform_indices = @transform_1, window_bounds = array<i64: 1, 2>}, {transform_indices = @transform_2, window_bounds = array<i64: 1>}, {transform_indices = @transform_3, window_bounds = array<i64: 1, 1, 128>}]} {
    %c0 = arith.constant 0 : index
    %c0_0 = arith.constant 0 : index
    %0 = vector.load %arg2[%c0, %c0_0] : memref<1x2xf32, #tpu.memory_space<vmem>>, vector<1x2xf32>
    %c0_1 = arith.constant 0 : index
    %c0_2 = arith.constant 0 : index
    %1 = vector.load %arg1[%c0_1, %c0_2] : memref<2x128xf32, #tpu.memory_space<vmem>>, vector<2x128xf32>
    %cst = arith.constant dense<0.000000e+00> : vector<1x128xf32>
    %2 = tpu.matmul %0, %1, %cst {dimension_numbers = #tpu.dot_dimension_numbers<[1], [0], [0], [1], [0, 0, 1, 1], [], []>} : vector<1x2xf32>, vector<2x128xf32>, vector<1x128xf32> -> vector<1x128xf32>
    %c0_3 = arith.constant 0 : index
    %3 = memref.load %arg3[%c0_3] : memref<1xf32, #tpu.memory_space<smem>>
    %4 = vector.broadcast %3 : f32 to vector<1x128xf32>
    %5 = arith.addf %2, %4 : vector<1x128xf32>
    %6 = arith.negf %5 : vector<1x128xf32>
    %7 = math.exp %6 : vector<1x128xf32>
    %cst_4 = arith.constant 1.000000e+00 : f32
    %8 = vector.broadcast %cst_4 : f32 to vector<1x128xf32>
    %9 = arith.addf %8, %7 : vector<1x128xf32>
    %10 = arith.divf %8, %9 : vector<1x128xf32>
    %c0_5 = arith.constant 0 : index
    %c0_6 = arith.constant 0 : index
    %c0_7 = arith.constant 0 : index
    %11 = vector.load %arg4[%c0_5, %c0_6, %c0_7] : memref<1x1x128xf32, #tpu.memory_space<vmem>>, vector<1x1x128xf32>
    %12 = vector.shape_cast %11 : vector<1x1x128xf32> to vector<1x128xf32>
    %13 = vector.shape_cast %10 : vector<1x128xf32> to vector<1x1x128xf32>
    tpu.vector_store %arg4[%c0_5, %c0_6, %c0_7], %13 {strides = array<i32>} : memref<1x1x128xf32, #tpu.memory_space<vmem>>, vector<1x1x128xf32>,
    return
  }
  func.func @transform_0(%arg0: i32) -> (i32, i32) {
    %c0_i32 = arith.constant 0 : i32
    %c0_i32_0 = arith.constant 0 : i32
    return %c0_i32, %arg0 : i32, i32
  }
  func.func @transform_1(%arg0: i32) -> (i32, i32) {
    %c0_i32 = arith.constant 0 : i32
    %c0_i32_0 = arith.constant 0 : i32
    %c0_i32_1 = arith.constant 0 : i32
    return %c0_i32, %c0_i32_0 : i32, i32
  }
  func.func @transform_2(%arg0: i32) -> i32 {
    %c0_i32 = arith.constant 0 : i32
    %c0_i32_0 = arith.constant 0 : i32
    return %c0_i32 : i32
  }
  func.func @transform_3(%arg0: i32) -> (i32, i32, i32) {
    %c0_i32 = arith.constant 0 : i32
    %c0_i32_0 = arith.constant 0 : i32
    %c0_i32_1 = arith.constant 0 : i32
    return %arg0, %c0_i32, %c0_i32_0 : i32, i32, i32
  }
}

</mosaic_0001>

<llo_original>
// kernel: tpu_custom_call.1
$region0: #{tpu_custom_call.1}
  #allocation0 [shape = 'u32[]', space=smem, size = 0x4, offset = 0x4, fixed_abs, tag = 'smem constant byte address 0x4 - core index']
  #allocation1 [shape = 'u32[72,128]{1,0:T(1,128)}', space=vmem, size = 0x9000, scoped, tag = 'internal scratch']
  #allocation2 [shape = 'f32[1]{0:T(128)S(6)}', space=smem, size = 0x200, scoped, tag = 'scoped memory for tpu_custom_call.1']
  %s0 = inlined_call_operand.vmem [shape: f32[2,128], index: 0, kind: input, shape index: {}]
  %s1 = inlined_call_operand.hbm [shape: f32[1,2], index: 1, kind: input, shape index: {}]
  %s2 = inlined_call_operand.<no memory space> [shape: f32[1], index: 2, kind: input, shape index: {}]
  %s3 = inlined_call_operand.hbm [shape: f32[1,1,128], index: 3, kind: output, shape index: {}]
  %s4 = sld [smem:[#allocation0]]
  $region26: #{tpu_custom_call.1} parent=0
    _
  %s6 = ssub.s32 1, %s4
  %s7 = scalar_select 0, %s6, %s4
  %8 = sst [smem:[#allocation2]] %s2
  $region1: #{tpu_custom_call.1} parent=0
    #allocation3 [shape = 'u8[512]{0}', space=vmem, size = 0x400, scoped, tag = 'input window, operand 1, single buffered']
    #allocation4 [shape = 's32[1]{0}', space=sflag, size = 0x4, scoped, tag = 'scoped memory for tpu_custom_call.1']
    #allocation5 [shape = 's32[1]{0}', space=sflag, size = 0x4, scoped, tag = 'scoped memory for tpu_custom_call.1']
    #allocation6 [shape = 'u8[512]{0}', space=vmem, size = 0x400, scoped, tag = 'output window, operand 0, single buffered']
    %9 = vsyncpa [#allocation4], 0
    %10 = vsyncpa [#allocation5], 0
    // Predicated region
    $region2: #{tpu_custom_call.1} parent=1 // pred_check
      _
    $region3: #{tpu_custom_call.1} parent=1 // pred_check_branch
      %12 = sbr.rel (0) target = $region5
    $region4: #{tpu_custom_call.1} parent=1 // pred_region
      _
    $region5: #{tpu_custom_call.1} parent=1 // pred_fallthru
      _
    // Predicated region
    $region6: #{tpu_custom_call.1} parent=1 // pred_check
      _
    $region7: #{tpu_custom_call.1} parent=1 // pred_check_branch
      %14 = sbr.rel (0) target = $region9
    $region8: #{tpu_custom_call.1} parent=1 // pred_region
      %16 = vsyncadd [#allocation4], 0
      %s18 = sshll.u32 %s1, 4
      %s19 = int_to_ptr.hbm [resolvable:$true] %s18
      %s20 = sshll.u32 [#allocation3], 4
      %s21 = int_to_ptr.vmem [resolvable:$true] %s20
      %23 = dma.hbm_to_vmem [thread:$0]  %s19, 16, %s21, [#allocation4]
    $region9: #{tpu_custom_call.1} parent=1 // pred_fallthru
      _
    // Predicated region
    $region10: #{tpu_custom_call.1} parent=1 // pred_check
      _
    $region11: #{tpu_custom_call.1} parent=1 // pred_check_branch
      %25 = sbr.rel (0) target = $region13
    $region12: #{tpu_custom_call.1} parent=1 // pred_region
      _
    $region13: #{tpu_custom_call.1} parent=1 // pred_fallthru
      _
    // Predicated region
    $region14: #{tpu_custom_call.1} parent=1 // pred_check
      _
    $region15: #{tpu_custom_call.1} parent=1 // pred_check_branch
      %27 = sbr.rel (0) target = $region17
    $region16: #{tpu_custom_call.1} parent=1 // pred_region
      %29 = dma.done [#allocation4], 16
    $region17: #{tpu_custom_call.1} parent=1 // pred_fallthru
      _
    %v30 = vld [vmem:[#allocation3] sm:$0x1]
    %v31 = vld [vmem:[%s0] sm:$0x3]
    %s32 = sld [smem:[#allocation2]]
    %v33 = vstv %s32
    %vm34 = vcmask 15360
    %v36 = vsel %vm34, %v30, 0
    %vm38 = vcmask 1041408
    %v40 = vsel %vm38, %v31, 0
    %42 = vmatpush.msra.mxu0 0.0
    %43 = vmatpush.msra.mxu0 0.0
    %44 = vmatpush.msra.mxu0 0.0
    %45 = vmatpush.msra.mxu0 0.0
    %46 = vmatpush.msra.mxu0 0.0
    %47 = vmatpush.msra.mxu0 0.0
    %48 = vmatpush.msra.mxu0 0.0
    %49 = vmatpush.msra.mxu0 0.0
    %50 = vmatpush.msra.mxu0 0.0
    %51 = vmatpush.msra.mxu0 0.0
    %52 = vmatpush.msra.mxu0 0.0
    %53 = vmatpush.msra.mxu0 0.0
    %54 = vmatpush.msra.mxu0 0.0
    %55 = vmatpush.msra.mxu0 0.0
    %56 = vmatpush.msra.mxu0 0.0
    %57 = vmatpush.msra.mxu0 %v40
    %58 = vmatmul.f32.gmra.mxu0 %v36
    %v59 = vpop.f32.mrf.mxu0
    %v60 = vadd.f32 %v33, %v59
    %61 = vdwg.mxu0
    %v62 = vxor.u32 %v60, 2147483648
    %v63 = vmul.f32 %v62, 1.442695
    %v64 = vpow.pop %v63
    %v65 = vadd.f32 %v64, 1.0
    %v66 = vrcp.pop %v65
    %v67 = vmul.f32 %v65, %v66
    %v68 = vsub.f32 1.0, %v67
    %v69 = vmul.f32 %v66, %v68
    %v70 = vadd.f32 %v66, %v69
    %vm71 = vweird.f32 %v65
    %vm72 = vweird.f32 %v66
    %vm73 = vmor %vm71, %vm72
    %v74 = vsel %vm73, %v66, %v70
    %v75 = vand.u32 2147483647, %v65
    %vm76 = vcmp.eq.f32.partialorder %v75, 8.507059e+37
    %v77 = vand.u32 %v65, 2147483648
    %v78 = vor.u32 1.1754944e-38, %v77
    %v79 = vsel %vm76, %v78, %v74
    %v80 = vmul.f32 1.0, %v79
    %81 = vst [vmem:[#allocation6] sm:$0x1] %v80
    // Predicated region
    $region18: #{tpu_custom_call.1} parent=1 // pred_check
      _
    $region19: #{tpu_custom_call.1} parent=1 // pred_check_branch
      %83 = sbr.rel (0) target = $region21
    $region20: #{tpu_custom_call.1} parent=1 // pred_region
      %85 = vsyncadd [#allocation5], 0
      %s87 = sshll.u32 [#allocation6], 4
      %s88 = int_to_ptr.vmem [resolvable:$true] %s87
      %s89 = sshll.u32 %s3, 4
      %s90 = int_to_ptr.hbm [resolvable:$true] %s89
      %92 = dma.vmem_to_hbm [thread:$0]  %s88, 16, %s90, [#allocation5]
    $region21: #{tpu_custom_call.1} parent=1 // pred_fallthru
      _
    // Predicated region
    $region22: #{tpu_custom_call.1} parent=1 // pred_check
      _
    $region23: #{tpu_custom_call.1} parent=1 // pred_check_branch
      %94 = sbr.rel (0) target = $region25
    $region24: #{tpu_custom_call.1} parent=1 // pred_region
      %96 = dma.done [#allocation5], 16
    $region25: #{tpu_custom_call.1} parent=1 // pred_fallthru
      _
    %97 = vsyncpa [#allocation4], 1
    %98 = vsyncpa [#allocation5], 1

</llo_original>
